<compile_context>
chip_gen: v5e
topology: v5e:2x2
jax: 0.10.0
libtpu: 0.0.40
codegen_flags: <defaults>
</compile_context>

<pallas_src>
import jax
import jax.numpy as jnp
from jax.experimental import pallas as pl
from jax.experimental.pallas import tpu as pltpu


def _context_vector_kernel(h_ref, a_ref, o_ref, acc_ref):
    # h_ref: (TB, TS, D), a_ref: (TB, TS), o_ref: (TB, D), acc_ref: (TB, D) f32
    s_idx = pl.program_id(1)

    @pl.when(s_idx == 0)
    def _init():
        acc_ref[...] = jnp.zeros_like(acc_ref)

    # Whole-tile multiply + step-axis reduce.  Kept as a single expression for
    # lowering robustness; the possible f32 temporary (and f32 cast for sub-f32
    # inputs) is accounted for in the VMEM-limit / tile-budget sizing below.
    h = h_ref[...].astype(jnp.float32)           # (TB, TS, D)
    a = a_ref[...].astype(jnp.float32)           # (TB, TS)
    acc_ref[...] += jnp.sum(h * a[:, :, None], axis=1)

    @pl.when(s_idx == pl.num_programs(1) - 1)
    def _finalize():
        o_ref[...] = acc_ref[...].astype(o_ref.dtype)


def _round_up(x, m):
    return (x + m - 1) // m * m


def _tpu_defaults():
    """Returns (vmem_capacity_bytes, h-tile budget, chip_has_two_tensorcores)."""
    vmem_cap = 64 << 20          # conservative fallback (v7x per-TC VMEM)
    two_cores = False
    try:
        info = pltpu.get_tpu_info()
        vmem_cap = int(info.vmem_capacity_bytes)
        # v7x: 64 MiB VMEM per TensorCore and 2 TCs/chip; v5e/v6e: 128 MiB, 1 TC.
        two_cores = vmem_cap <= (64 << 20)
    except Exception:
        pass
    # v7x streams HBM at ~3.2 TB/s, so bigger tiles are needed to amortize the
    # fixed ~0.35us per-grid-step overhead; 4 MiB already sits near roofline on
    # v5e/v6e.
    budget = (6 << 20) if vmem_cap <= (64 << 20) else (4 << 20)
    return vmem_cap, budget, two_cores


def _tb_options(B):
    """Batch tiles that never need padding and satisfy the (8,128) rule on the
    (TB, S) / (TB, D) blocks: multiples of 8 dividing B, plus B itself."""
    opts = {d for d in range(8, B + 1, 8) if B % d == 0}
    opts.add(B)
    return sorted(opts, reverse=True)


def _ts_options(S):
    """Step tiles: multiples of 128 dividing S (S is the lane dim of the `a`
    block), plus the full S."""
    opts = {d for d in range(128, S, 128) if S % d == 0}
    opts.add(S)
    return sorted(opts, reverse=True)


def _choose_tiles(B, S, D, itemsize, budget):
    """Pick (TB, TS) with TD == D.  Prefer TS == S (fully contiguous rows, no
    reduction steps); shrink TB first, and only then tile the step axis."""
    tb_opts = _tb_options(B)
    ts_opts = _ts_options(S)
    for ts in ts_opts:                       # ts_opts[0] == S
        for tb in tb_opts:                   # descending: largest fit wins
            if tb * ts * D * itemsize <= budget:
                return tb, ts
    # Nothing fits the budget: smallest expressible tile, rely on the capped
    # vmem limit (pathological shapes only).
    return tb_opts[-1], ts_opts[-1]


def _vmem_limit(TB, TS, D, in_itemsize, out_itemsize, vmem_cap):
    """Size the VMEM limit from the actual buffers instead of a flat constant."""
    tb = _round_up(TB, 8)
    ts = _round_up(TS, 8)
    d = _round_up(D, 128)
    h_tile = tb * ts * d * in_itemsize
    a_tile = tb * _round_up(TS, 128) * in_itemsize
    o_tile = tb * d * out_itemsize
    acc = tb * d * 4
    # Mosaic may materialize the f32 weighted product (and an f32 cast of the
    # h tile for sub-f32 inputs) in VMEM.
    tmp = (1 if in_itemsize >= 4 else 2) * tb * ts * d * 4
    need = 2 * (h_tile + a_tile + o_tile) + acc + tmp + (4 << 20)
    cap = max(vmem_cap - (8 << 20), 16 << 20)
    return int(min(max(need, 16 << 20), cap))


def context_vector(h, a, *, tile_budget_bytes=None):
    """h: (B, S, D), a: (B, S) -> (B, D) = sum_s h[:, s, :] * a[:, s, None]."""
    B, S, D = h.shape
    assert a.shape == (B, S), (h.shape, a.shape)

    out_dtype = jnp.result_type(h.dtype, a.dtype)
    in_itemsize = jnp.dtype(h.dtype).itemsize
    a_itemsize = jnp.dtype(a.dtype).itemsize
    out_itemsize = jnp.dtype(out_dtype).itemsize

    vmem_cap, default_budget, two_cores = _tpu_defaults()
    budget = int(tile_budget_bytes) if tile_budget_bytes else default_budget

    TB, TS = _choose_tiles(B, S, D, in_itemsize, budget)

    # v7x megacore: only the "parallel" batch axis is split across the two
    # TensorCores, so try to give it >= 2 steps -- but only via a divisor split
    # (never pad).  Single-TC chips (v5e/v6e) keep the single step.
    if two_cores and TB == B:
        proper = [t for t in _tb_options(B) if t < B]
        if proper:
            TB = proper[0]

    gb = B // TB
    gs = S // TS

    cost = pl.CostEstimate(
        flops=2 * B * S * D,
        transcendentals=0,
        bytes_accessed=(B * S * D * in_itemsize
                        + B * S * a_itemsize
                        + B * D * out_itemsize),
    )

    return pl.pallas_call(
        _context_vector_kernel,
        out_shape=jax.ShapeDtypeStruct((B, D), out_dtype),
        grid_spec=pltpu.PrefetchScalarGridSpec(
            num_scalar_prefetch=0,
            grid=(gb, gs),
            in_specs=[
                pl.BlockSpec((TB, TS, D), lambda b, s: (b, s, 0)),
                pl.BlockSpec((TB, TS), lambda b, s: (b, s)),
            ],
            out_specs=pl.BlockSpec((TB, D), lambda b, s: (b, 0)),
            scratch_shapes=[pltpu.VMEM((TB, D), jnp.float32)],
        ),
        compiler_params=pltpu.CompilerParams(
            dimension_semantics=("parallel", "arbitrary"),
            vmem_limit_bytes=_vmem_limit(TB, TS, D, in_itemsize,
                                         out_itemsize, vmem_cap),
        ),
        cost_estimate=cost,
    )(h, a)


if __name__ == "__main__":
    key = jax.random.PRNGKey(0)

    # Test 1: small shapes consistent with the module (batch=2, step=8, feat=32).
    B, S, D = 2, 8, 32
    kh, ka, key = jax.random.split(key, 3)
    h = jax.random.normal(kh, (B, S, D), dtype=jnp.float32)
    a = jax.random.normal(ka, (B, S), dtype=jnp.float32)
    out = jax.block_until_ready(context_vector(h, a))
    ref = jnp.sum(h * a[..., None], axis=1)
    assert out.shape == (B, D)
    assert jnp.allclose(out, ref, atol=1e-5, rtol=1e-5)

    # Test 2: B=20 previously triggered batch padding; now handled pad-free
    # (TB == B is always a valid divisor choice).
    B2, S2, D2 = 20, 16, 256
    kh2, ka2, key = jax.random.split(key, 3)
    h2 = jax.random.normal(kh2, (B2, S2, D2), dtype=jnp.float32)
    a2 = jax.random.normal(ka2, (B2, S2), dtype=jnp.float32)
    out2 = jax.block_until_ready(context_vector(h2, a2))
    ref2 = jnp.sum(h2 * a2[..., None], axis=1)
    assert out2.shape == (B2, D2)
    assert jnp.allclose(out2, ref2, atol=1e-4, rtol=1e-4)

    # Test 3: force the step-axis reduction path (TS < S, f32 accumulator +
    # pl.when init/finalize) by shrinking the tile budget.
    B3, S3, D3 = 4, 256, 128
    kh3, ka3 = jax.random.split(key)
    h3 = jax.random.normal(kh3, (B3, S3, D3), dtype=jnp.float32)
    a3 = jax.random.normal(ka3, (B3, S3), dtype=jnp.float32)
    out3 = jax.block_until_ready(
        context_vector(h3, a3, tile_budget_bytes=256 * 1024))
    ref3 = jnp.sum(h3 * a3[..., None], axis=1)
    assert out3.shape == (B3, D3)
    assert jnp.allclose(out3, ref3, atol=1e-4, rtol=1e-4)

    print("KERNEL_OK")
</pallas_src>

<mosaic_0001>
module attributes {stable_mosaic.version = 11 : i64} {
  func.func @_context_vector_kernel(%arg0: i32, %arg1: i32, %arg2: memref<2x8x32xf32, #tpu.memory_space<vmem>>, %arg3: memref<2x8xf32, #tpu.memory_space<vmem>>, %arg4: memref<2x32xf32, #tpu.memory_space<vmem>>, %arg5: memref<2x32xf32, #tpu.memory_space<vmem>>) attributes {dimension_semantics = [#tpu.dimension_semantics<parallel>, #tpu.dimension_semantics<arbitrary>], iteration_bounds = array<i64: 1, 1>, scalar_prefetch = 0 : i64, scratch_operands = 1 : i64, tpu.core_type = #tpu.core_type<tc>, window_params = [{transform_indices = @transform_0, window_bounds = array<i64: 2, 8, 32>}, {transform_indices = @transform_1, window_bounds = array<i64: 2, 8>}, {transform_indices = @transform_2, window_bounds = array<i64: 2, 32>}]} {
    %c0_i32 = arith.constant 0 : i32
    %0 = arith.cmpi eq, %arg1, %c0_i32 : i32
    %1 = arith.extui %0 : i1 to i32
    %c0_i32_0 = arith.constant 0 : i32
    %2 = arith.cmpi ne, %1, %c0_i32_0 : i32
    scf.if %2 {
      %cst_11 = arith.constant 0.000000e+00 : f32
      %15 = vector.broadcast %cst_11 : f32 to vector<2x32xf32>
      %c0_12 = arith.constant 0 : index
      %c0_13 = arith.constant 0 : index
      %16 = vector.load %arg5[%c0_12, %c0_13] : memref<2x32xf32, #tpu.memory_space<vmem>>, vector<2x32xf32>
      tpu.vector_store %arg5[%c0_12, %c0_13], %15 {strides = array<i32>} : memref<2x32xf32, #tpu.memory_space<vmem>>, vector<2x32xf32>,
    } else {
    }
    %c0 = arith.constant 0 : index
    %c0_1 = arith.constant 0 : index
    %c0_2 = arith.constant 0 : index
    %3 = vector.load %arg2[%c0, %c0_1, %c0_2] : memref<2x8x32xf32, #tpu.memory_space<vmem>>, vector<2x8x32xf32>
    %c0_3 = arith.constant 0 : index
    %c0_4 = arith.constant 0 : index
    %4 = vector.load %arg3[%c0_3, %c0_4] : memref<2x8xf32, #tpu.memory_space<vmem>>, vector<2x8xf32>
    %c0_5 = arith.constant 0 : index
    %c0_6 = arith.constant 0 : index
    %5 = vector.load %arg5[%c0_5, %c0_6] : memref<2x32xf32, #tpu.memory_space<vmem>>, vector<2x32xf32>
    %6 = vector.shape_cast %4 : vector<2x8xf32> to vector<2x8x1xf32>
    %7 = vector.broadcast %6 : vector<2x8x1xf32> to vector<2x8x32xf32>
    %8 = arith.mulf %3, %7 : vector<2x8x32xf32>
    %cst = arith.constant dense<0.000000e+00> : vector<2x32xf32>
    %9 = vector.multi_reduction <add>, %8, %cst [1] : vector<2x8x32xf32> to vector<2x32xf32>
    %10 = arith.addf %5, %9 : vector<2x32xf32>
    %c0_7 = arith.constant 0 : index
    %c0_8 = arith.constant 0 : index
    %11 = vector.load %arg5[%c0_7, %c0_8] : memref<2x32xf32, #tpu.memory_space<vmem>>, vector<2x32xf32>
    tpu.vector_store %arg5[%c0_7, %c0_8], %10 {strides = array<i32>} : memref<2x32xf32, #tpu.memory_space<vmem>>, vector<2x32xf32>,
    %c0_i32_9 = arith.constant 0 : i32
    %12 = arith.cmpi eq, %arg1, %c0_i32_9 : i32
    %13 = arith.extui %12 : i1 to i32
    %c0_i32_10 = arith.constant 0 : i32
    %14 = arith.cmpi ne, %13, %c0_i32_10 : i32
    scf.if %14 {
      %c0_11 = arith.constant 0 : index
      %c0_12 = arith.constant 0 : index
      %15 = vector.load %arg5[%c0_11, %c0_12] : memref<2x32xf32, #tpu.memory_space<vmem>>, vector<2x32xf32>
      %c0_13 = arith.constant 0 : index
      %c0_14 = arith.constant 0 : index
      %16 = vector.load %arg4[%c0_13, %c0_14] : memref<2x32xf32, #tpu.memory_space<vmem>>, vector<2x32xf32>
      tpu.vector_store %arg4[%c0_13, %c0_14], %15 {strides = array<i32>} : memref<2x32xf32, #tpu.memory_space<vmem>>, vector<2x32xf32>,
    } else {
    }
    return
  }
  func.func @transform_0(%arg0: i32, %arg1: i32) -> (i32, i32, i32) {
    %c0_i32 = arith.constant 0 : i32
    %c0_i32_0 = arith.constant 0 : i32
    return %arg0, %arg1, %c0_i32 : i32, i32, i32
  }
  func.func @transform_1(%arg0: i32, %arg1: i32) -> (i32, i32) {
    %c0_i32 = arith.constant 0 : i32
    return %arg0, %arg1 : i32, i32
  }
  func.func @transform_2(%arg0: i32, %arg1: i32) -> (i32, i32) {
    %c0_i32 = arith.constant 0 : i32
    %c0_i32_0 = arith.constant 0 : i32
    return %arg0, %c0_i32 : i32, i32
  }
}

</mosaic_0001>

<llo_original>
// kernel: tpu_custom_call.1
$region0: #{tpu_custom_call.1}
  #allocation0 [shape = 'u32[]', space=smem, size = 0x4, offset = 0x4, fixed_abs, tag = 'smem constant byte address 0x4 - core index']
  #allocation1 [shape = 'u32[72,128]{1,0:T(1,128)}', space=vmem, size = 0x9000, scoped, tag = 'internal scratch']
  #allocation2 [shape = 'f32[2,32]{1,0:T(2,128)}', space=vmem, size = 0x400, scoped, tag = 'scratch operand']
  %s0 = inlined_call_operand.hbm [shape: f32[2,8,32], index: 0, kind: input, shape index: {}]
  %s1 = inlined_call_operand.hbm [shape: f32[2,8], index: 1, kind: input, shape index: {}]
  %s2 = inlined_call_operand.hbm [shape: f32[2,32], index: 2, kind: output, shape index: {}]
  %s3 = sld [smem:[#allocation0]]
  $region34: #{tpu_custom_call.1} parent=0
    _
  %s5 = ssub.s32 1, %s3
  %s6 = scalar_select 0, %s5, %s3
  $region1: #{tpu_custom_call.1} parent=0
    #allocation3 [shape = 'u8[8192]{0}', space=vmem, size = 0x2000, scoped, tag = 'input window, operand 0, single buffered']
    #allocation4 [shape = 's32[1]{0}', space=sflag, size = 0x4, scoped, tag = 'scoped memory for tpu_custom_call.1']
    #allocation5 [shape = 's32[1]{0}', space=sflag, size = 0x4, scoped, tag = 'scoped memory for tpu_custom_call.1']
    #allocation6 [shape = 'u8[1024]{0}', space=vmem, size = 0x400, scoped, tag = 'input window, operand 1, single buffered']
    #allocation7 [shape = 's32[1]{0}', space=sflag, size = 0x4, scoped, tag = 'scoped memory for tpu_custom_call.1']
    #allocation8 [shape = 'u8[1024]{0}', space=vmem, size = 0x400, scoped, tag = 'output window, operand 0, single buffered']
    %7 = vsyncpa [#allocation4], 0
    %8 = vsyncpa [#allocation7], 0
    %9 = vsyncpa [#allocation5], 0
    // Predicated region
    $region2: #{tpu_custom_call.1} parent=1 // pred_check
      _
    $region3: #{tpu_custom_call.1} parent=1 // pred_check_branch
      %11 = sbr.rel (0) target = $region5
    $region4: #{tpu_custom_call.1} parent=1 // pred_region
      %13 = vsyncadd [#allocation4], 0
      %s14 = sshll.u32 %s0, 4
      %s15 = int_to_ptr.hbm [resolvable:$true] %s14
      %s16 = sshll.u32 [#allocation3], 4
      %s17 = int_to_ptr.vmem [resolvable:$true] %s16
      %22 = dma.hbm_to_vmem [thread:$0]  %s15, 256, %s17, [#allocation4], 128, 128, 8
    $region5: #{tpu_custom_call.1} parent=1 // pred_fallthru
      _
    // Predicated region
    $region6: #{tpu_custom_call.1} parent=1 // pred_check
      _
    $region7: #{tpu_custom_call.1} parent=1 // pred_check_branch
      %24 = sbr.rel (0) target = $region9
    $region8: #{tpu_custom_call.1} parent=1 // pred_region
      %26 = vsyncadd [#allocation7], 0
      %s28 = sshll.u32 %s1, 4
      %s29 = int_to_ptr.hbm [resolvable:$true] %s28
      %s30 = sshll.u32 [#allocation6], 4
      %s31 = int_to_ptr.vmem [resolvable:$true] %s30
      %33 = dma.hbm_to_vmem [thread:$0]  %s29, 32, %s31, [#allocation7]
    $region9: #{tpu_custom_call.1} parent=1 // pred_fallthru
      _
    // Predicated region
    $region10: #{tpu_custom_call.1} parent=1 // pred_check
      _
    $region11: #{tpu_custom_call.1} parent=1 // pred_check_branch
      %35 = sbr.rel (0) target = $region13
    $region12: #{tpu_custom_call.1} parent=1 // pred_region
      %37 = dma.done [#allocation4], 256
    $region13: #{tpu_custom_call.1} parent=1 // pred_fallthru
      _
    // Predicated region
    $region14: #{tpu_custom_call.1} parent=1 // pred_check
      _
    $region15: #{tpu_custom_call.1} parent=1 // pred_check_branch
      %39 = sbr.rel (0) target = $region17
    $region16: #{tpu_custom_call.1} parent=1 // pred_region
      %41 = dma.done [#allocation7], 32
    $region17: #{tpu_custom_call.1} parent=1 // pred_fallthru
      _
    %p42 = scmp.eq.s32.totalorder 0, 0
    // Predicated region
    $region18: #{tpu_custom_call.1} parent=1 // pred_check
      %p43 = pneg %p42
    $region19: #{tpu_custom_call.1} parent=1 // pred_check_branch
      %45 = sbr.rel (%p43) target = $region21
    $region20: #{tpu_custom_call.1} parent=1 // pred_region
      %vm46 = vcmask 254976
      %47 = vst.msk [vmem:[#allocation2] sm:$0x3] %vm46, 0.0
    $region21: #{tpu_custom_call.1} parent=1 // pred_fallthru
      _
    %v48 = vld [vmem:[#allocation3] sm:$0xff]
    %v49 = vld [vmem:[#allocation3 + $0x8] sm:$0xff]
    %v50 = vld [vmem:[#allocation6] sm:$0x3]
    %v51 = vld [vmem:[#allocation2] sm:$0x3]
    %v52 = vperm.slane %v50, 0
    %v53 = vlaneseq
    %v54 = vshrl.u32 %v53, 7
    %56 = vset.pattern.permute.xlu0 %v54
    %57 = vperm.xlu0 %56, %v52
    %v58 = vpop.permute.xlu0 %57
    %v59 = vperm.slane %v50, 1
    %v60 = vlaneseq
    %v61 = vshrl.u32 %v60, 7
    %63 = vset.pattern.permute.xlu0 %v61
    %64 = vperm.xlu0 %63, %v59
    %v65 = vpop.permute.xlu0 %64
    %v66 = vmul.f32 %v48, %v58
    %v67 = vmul.f32 %v49, %v65
    %vm68 = vcmask 261120
    %v69 = vsel %vm68, %v66, 0.0
    %v70 = vrot.slane %v69, 4
    %v71 = vadd.f32 %v69, %v70
    %v72 = vrot.slane %v71, 2
    %v73 = vadd.f32 %v71, %v72
    %v74 = vrot.slane %v73, 1
    %v75 = vadd.f32 %v73, %v74
    %v76 = vsel %vm68, %v67, 0.0
    %v77 = vrot.slane %v76, 4
    %v78 = vadd.f32 %v76, %v77
    %v79 = vrot.slane %v78, 2
    %v80 = vadd.f32 %v78, %v79
    %v81 = vrot.slane %v80, 1
    %v82 = vadd.f32 %v80, %v81
    %vm85 = vcmask 1041409
    %v86 = vsel %vm85, %v82, %v75
    %v88 = vadd.f32 %v51, %v86
    %vm89 = vcmask 254976
    %90 = vst.msk [vmem:[#allocation2] sm:$0x3] %vm89, %v88
    // Predicated region
    $region22: #{tpu_custom_call.1} parent=1 // pred_check
      %p91 = pneg %p42
    $region23: #{tpu_custom_call.1} parent=1 // pred_check_branch
      %93 = sbr.rel (%p91) target = $region25
    $region24: #{tpu_custom_call.1} parent=1 // pred_region
      %v94 = vld [vmem:[#allocation2] sm:$0x3]
      %95 = vst.msk [vmem:[#allocation8] sm:$0x3] %vm89, %v94
    $region25: #{tpu_custom_call.1} parent=1 // pred_fallthru
      _
    // Predicated region
    $region26: #{tpu_custom_call.1} parent=1 // pred_check
      _
    $region27: #{tpu_custom_call.1} parent=1 // pred_check_branch
      %97 = sbr.rel (0) target = $region29
    $region28: #{tpu_custom_call.1} parent=1 // pred_region
      %99 = vsyncadd [#allocation5], 0
      %s101 = sshll.u32 [#allocation8], 4
      %s102 = int_to_ptr.vmem [resolvable:$true] %s101
      %s103 = sshll.u32 %s2, 4
      %s104 = int_to_ptr.hbm [resolvable:$true] %s103
      %106 = dma.vmem_to_hbm [thread:$0]  %s102, 32, %s104, [#allocation5]
    $region29: #{tpu_custom_call.1} parent=1 // pred_fallthru
      _
    // Predicated region
    $region30: #{tpu_custom_call.1} parent=1 // pred_check
      _
    $region31: #{tpu_custom_call.1} parent=1 // pred_check_branch
      %108 = sbr.rel (0) target = $region33
    $region32: #{tpu_custom_call.1} parent=1 // pred_region
      %110 = dma.done [#allocation5], 32
    $region33: #{tpu_custom_call.1} parent=1 // pred_fallthru
      _
    %111 = vsyncpa [#allocation4], 1
    %112 = vsyncpa [#allocation7], 1
    %113 = vsyncpa [#allocation5], 1

</llo_original>
